<compile_context>
chip_gen: v5e
topology: v5e:2x2
jax: 0.10.0
libtpu: 0.0.40
codegen_flags: <defaults>
</compile_context>

<pallas_src>
import functools
import math

import jax
import jax.numpy as jnp
from jax.experimental import pallas as pl
from jax.experimental.pallas import tpu as pltpu

MAX_CHANNELS = 512
MIN_WORKING_RESOLUTION = 8
NUM_IMG_CHANNELS = 3
LATENT_DIM = 512

LEAKY_SLOPE = 0.2          # nn.LeakyReLU(0.2)
INSTANCE_NORM_EPS = 1e-5   # nn.InstanceNorm2d default eps
VMEM_LIMIT_BYTES = 48 * 1024 * 1024   # fits v7x (64 MiB) with headroom


def _round_up(x, m):
    return (x + m - 1) // m * m


def _cparams(dims):
    return pltpu.CompilerParams(dimension_semantics=dims,
                                vmem_limit_bytes=VMEM_LIMIT_BYTES)


# ---------------------------------------------------------------------------
# Kernel 1: per-output-row conv (reflect-padded input, no im2col).
#   args = k row refs (shifted views of the padded input), weight, bias, out.
#   weight is pre-scaled, laid out [k*k, Cin, Cout_tile].
# ---------------------------------------------------------------------------
def _conv_row_kernel(*args, ksize, out_w):
    row_refs = args[:ksize]
    w_ref, b_ref, o_ref = args[ksize], args[ksize + 1], args[ksize + 2]
    tn = o_ref.shape[-1]
    acc = jnp.zeros((out_w, tn), jnp.float32)
    for di in range(ksize):
        row = row_refs[di][0, 0]                       # (Wp, Cin), compute dtype
        for dj in range(ksize):
            tap = row[dj:dj + out_w, :]                # (out_w, Cin) static slice
            acc = acc + jnp.dot(tap, w_ref[di * ksize + dj],
                                preferred_element_type=jnp.float32)
    o_ref[0, 0] = (acc + b_ref[...]).astype(o_ref.dtype)


def conv2d_pallas(p, x, out_dtype):
    """Equalized-LR conv with reflect padding; x is NHWC (compute dtype)."""
    B, H, W, Cin = x.shape
    k, pad = p['ksize'], p['padding']
    Cout = p['out_ch']
    assert H + 2 * pad - k + 1 == H, "only 'same' convs appear in this network"
    w = p['w_kernel']            # (k*k, Cin, Mp), gain folded, compute dtype
    bias = p['b_kernel']         # (1, Mp) f32
    Mp = w.shape[-1]
    x = x.astype(w.dtype)
    if pad:
        x = jnp.pad(x, ((0, 0), (pad, pad), (pad, pad), (0, 0)), mode='reflect')
    Hp, Wp = x.shape[1], x.shape[2]

    # Column-tile wide outputs so v7x's two TensorCores both get work on the
    # low-resolution 512-channel layers (free on v5e/v6e).
    tn = 256 if (Mp > 256 and Mp % 256 == 0) else Mp
    mt = Mp // tn

    def row_spec(di):
        return pl.BlockSpec((1, 1, Wp, Cin), lambda m, b, i: (b, i + di, 0, 0))

    in_specs = [row_spec(di) for di in range(k)]
    in_specs += [pl.BlockSpec((k * k, Cin, tn), lambda m, b, i: (0, 0, m)),
                 pl.BlockSpec((1, tn), lambda m, b, i: (0, m))]
    out_spec = pl.BlockSpec((1, 1, W, tn), lambda m, b, i: (b, i, 0, m))

    out = pl.pallas_call(
        functools.partial(_conv_row_kernel, ksize=k, out_w=W),
        out_shape=jax.ShapeDtypeStruct((B, H, W, Mp), out_dtype),
        grid_spec=pltpu.PrefetchScalarGridSpec(
            num_scalar_prefetch=0,
            grid=(mt, B, H),
            in_specs=in_specs,
            out_specs=out_spec),
        compiler_params=_cparams(("parallel", "parallel", "parallel")),
    )(*([x] * k + [w, bias]))
    if Mp != Cout:
        out = out[..., :Cout]
    return out


# ---------------------------------------------------------------------------
# Kernel 2a/2b: fused NoiseLayer + InstanceNorm2d + AdaIN + LeakyReLU,
# HW-tiled: streaming (sum, sumsq) stats pass, then a normalize/apply pass.
# ---------------------------------------------------------------------------
def _in_stats_kernel(x_ref, n_ref, ns_ref, st_ref):
    @pl.when(pl.program_id(1) == 0)
    def _():
        st_ref[...] = jnp.zeros_like(st_ref)
    t = x_ref[0].astype(jnp.float32) + ns_ref[0] * n_ref[0].astype(jnp.float32)
    s1 = jnp.sum(t, axis=0, keepdims=True)             # (1, C)
    s2 = jnp.sum(t * t, axis=0, keepdims=True)         # (1, C)
    st_ref[0] += jnp.concatenate([s1, s2], axis=0)     # (2, C)


def _in_apply_kernel(x_ref, n_ref, ns_ref, st_ref, ss_ref, sb_ref, o_ref, *,
                     inv_n, eps, slope):
    t = x_ref[0].astype(jnp.float32) + ns_ref[0] * n_ref[0].astype(jnp.float32)
    mean = st_ref[0, 0:1, :] * inv_n                   # (1, C)
    var = st_ref[0, 1:2, :] * inv_n - mean * mean      # biased, like InstanceNorm2d
    inv_std = jax.lax.rsqrt(var + eps)
    y = (t - mean) * (inv_std * ss_ref[0]) + sb_ref[0]
    y = jnp.where(y >= 0.0, y, y * slope)              # LeakyReLU(0.2)
    o_ref[0] = y.astype(o_ref.dtype)


def noise_adain_lrelu(x, noise, noise_scale, style_s, style_b, out_dtype):
    """x: [B,H,W,C], noise: [B,H,W], noise_scale: [C], style_s/b: [B,C]."""
    B, H, W, C = x.shape
    HW = H * W
    thw = HW if HW <= 2048 else 2048
    assert HW % thw == 0
    nhw = HW // thw

    x2 = x.reshape(B, HW, C)
    noise2 = noise.reshape(B, HW, 1).astype(jnp.float32)
    nscale = noise_scale.reshape(1, 1, C).astype(jnp.float32)
    ss = style_s.reshape(B, 1, C).astype(jnp.float32)
    sb = style_b.reshape(B, 1, C).astype(jnp.float32)

    stats = pl.pallas_call(
        _in_stats_kernel,
        out_shape=jax.ShapeDtypeStruct((B, 2, C), jnp.float32),
        grid_spec=pltpu.PrefetchScalarGridSpec(
            num_scalar_prefetch=0,
            grid=(B, nhw),
            in_specs=[pl.BlockSpec((1, thw, C), lambda b, h: (b, h, 0)),
                      pl.BlockSpec((1, thw, 1), lambda b, h: (b, h, 0)),
                      pl.BlockSpec((1, 1, C), lambda b, h: (0, 0, 0))],
            out_specs=pl.BlockSpec((1, 2, C), lambda b, h: (b, 0, 0))),
        compiler_params=_cparams(("parallel", "arbitrary")),
    )(x2, noise2, nscale)

    out = pl.pallas_call(
        functools.partial(_in_apply_kernel, inv_n=1.0 / HW,
                          eps=INSTANCE_NORM_EPS, slope=LEAKY_SLOPE),
        out_shape=jax.ShapeDtypeStruct((B, HW, C), out_dtype),
        grid_spec=pltpu.PrefetchScalarGridSpec(
            num_scalar_prefetch=0,
            grid=(B, nhw),
            in_specs=[pl.BlockSpec((1, thw, C), lambda b, h: (b, h, 0)),
                      pl.BlockSpec((1, thw, 1), lambda b, h: (b, h, 0)),
                      pl.BlockSpec((1, 1, C), lambda b, h: (0, 0, 0)),
                      pl.BlockSpec((1, 2, C), lambda b, h: (b, 0, 0)),
                      pl.BlockSpec((1, 1, C), lambda b, h: (b, 0, 0)),
                      pl.BlockSpec((1, 1, C), lambda b, h: (b, 0, 0))],
            out_specs=pl.BlockSpec((1, thw, C), lambda b, h: (b, h, 0))),
        compiler_params=_cparams(("parallel", "parallel")),
    )(x2, noise2, nscale, stats, ss, sb)
    return out.reshape(B, H, W, C)


# ---------------------------------------------------------------------------
# Kernel 3: plain fused linear (all AdaIN affine layers in one matmul).
# ---------------------------------------------------------------------------
def _linear_kernel(x_ref, w_ref, b_ref, o_ref):
    acc = jnp.dot(x_ref[...], w_ref[...], preferred_element_type=jnp.float32)
    o_ref[...] = (acc + b_ref[...]).astype(o_ref.dtype)


def linear_pallas(x, w_t, bias2d):
    """x: [B,K], w_t: [K,M] (gain folded, compute dtype), bias2d: [1,M] f32."""
    B, K = x.shape
    M = w_t.shape[1]
    Bp = _round_up(B, 8)
    xp = x.astype(w_t.dtype)
    if Bp != B:
        xp = jnp.pad(xp, ((0, Bp - B), (0, 0)))
    out = pl.pallas_call(
        _linear_kernel,
        out_shape=jax.ShapeDtypeStruct((Bp, M), jnp.float32),
        grid_spec=pltpu.PrefetchScalarGridSpec(
            num_scalar_prefetch=0,
            grid=(1,),
            in_specs=[pl.BlockSpec((Bp, K), lambda i: (0, 0)),
                      pl.BlockSpec((K, M), lambda i: (0, 0)),
                      pl.BlockSpec((1, M), lambda i: (0, 0))],
            out_specs=pl.BlockSpec((Bp, M), lambda i: (0, 0))),
        compiler_params=_cparams(("arbitrary",)),
    )(xp, w_t, bias2d)
    return out[:B]


# ---------------------------------------------------------------------------
# Parameter init (mirrors the PyTorch module init; gains folded for kernels)
# ---------------------------------------------------------------------------
def init_conv(key, in_ch, out_ch, ksize, padding, compute_dtype):
    w = jax.random.normal(key, (out_ch, in_ch, ksize, ksize), jnp.float32)
    gain = math.sqrt(2.0) / math.sqrt(in_ch * ksize * ksize)
    bias = jnp.zeros((out_ch,), jnp.float32)
    # Kernel layout: fold gain, reorder [co,ci,kh,kw] -> [k*k(di,dj), ci, co].
    w_k = jnp.transpose(w * gain, (2, 3, 1, 0)).reshape(ksize * ksize, in_ch, out_ch)
    b_k = bias
    m_pad = out_ch
    if out_ch > 128 and out_ch % 128 != 0:   # never triggers for this net
        m_pad = _round_up(out_ch, 128)
        w_k = jnp.pad(w_k, ((0, 0), (0, 0), (0, m_pad - out_ch)))
        b_k = jnp.pad(bias, (0, m_pad - out_ch))
    return dict(w=w, bias=bias, weight_gain=gain, ksize=ksize, padding=padding,
                in_ch=in_ch, out_ch=out_ch,
                w_kernel=w_k.astype(compute_dtype),
                b_kernel=b_k.reshape(1, m_pad).astype(jnp.float32))


def init_linear(key, in_f, out_f, bias_init, lr_multiplier=1.0):
    w = jax.random.normal(key, (out_f, in_f), jnp.float32) / lr_multiplier
    gain = lr_multiplier * math.sqrt(2.0) / math.sqrt(in_f)
    bias = jnp.full((out_f,), float(bias_init), jnp.float32)
    return dict(w=w, bias=bias, weight_gain=gain, bias_gain=float(lr_multiplier))


def upsample_nearest2x(x):
    return jnp.repeat(jnp.repeat(x, 2, axis=1), 2, axis=2)


# ---------------------------------------------------------------------------
# SynthesisNetwork (non-progressive forward path)
# ---------------------------------------------------------------------------
class SynthesisNetworkPallas:
    def __init__(self, final_resolution, *, max_channels=MAX_CHANNELS,
                 latent_dim=LATENT_DIM, key, compute_dtype=jnp.bfloat16):
        self.latent_dim = latent_dim
        self.compute_dtype = compute_dtype
        keys = iter(jax.random.split(key, 256))

        resolutions = [2 ** i for i in range(2, 12) if 2 ** i <= final_resolution]
        self.resolutions = resolutions

        def make_block(in_ch, out_ch, is_first):
            blk = dict(is_first=is_first, in_ch=in_ch, out_ch=out_ch)
            if not is_first:
                blk['conv0'] = init_conv(next(keys), in_ch, out_ch, 3, 1, compute_dtype)
            blk['noise0'] = jnp.zeros((out_ch,), jnp.float32)   # NoiseLayer scaling
            blk['ada0_s'] = init_linear(next(keys), latent_dim, out_ch, 1.0)
            blk['ada0_b'] = init_linear(next(keys), latent_dim, out_ch, 0.0)
            blk['conv1'] = init_conv(next(keys), out_ch, out_ch, 3, 1, compute_dtype)
            blk['noise1'] = jnp.zeros((out_ch,), jnp.float32)
            blk['ada1_s'] = init_linear(next(keys), latent_dim, out_ch, 1.0)
            blk['ada1_b'] = init_linear(next(keys), latent_dim, out_ch, 0.0)
            return blk

        self.blocks = [make_block(max_channels, max_channels, is_first=True)]
        in_ch, out_ch = max_channels, max_channels
        for res in resolutions[1:]:
            if res > 32:
                in_ch, out_ch = out_ch, out_ch // 2
            self.blocks.append(make_block(in_ch, out_ch, is_first=False))

        self.to_rgb = init_conv(next(keys), out_ch, NUM_IMG_CHANNELS, 1, 0, compute_dtype)
        self.x_init = jnp.ones((1, 4, 4, max_channels), jnp.float32)   # NHWC

        # Fuse ALL AdaIN affine Linears into one matmul (gains folded at init).
        wts, biases = [], []
        self.style_slices = []
        off = 0
        for blk in self.blocks:
            sl = {}
            for name in ('ada0_s', 'ada0_b', 'ada1_s', 'ada1_b'):
                p = blk[name]
                out_f = p['w'].shape[0]
                wts.append(p['w'].T * p['weight_gain'])
                biases.append(p['bias'] * p['bias_gain'])
                sl[name] = (off, off + out_f)
                off += out_f
            self.style_slices.append(sl)
        self.affine_w_t = jnp.concatenate(wts, axis=1).astype(compute_dtype)
        self.affine_bias = jnp.concatenate(biases, axis=0).reshape(1, -1).astype(jnp.float32)

    def make_noises(self, key, batch):
        noises = []
        keys = iter(jax.random.split(key, 2 * len(self.blocks)))
        res = 4
        for blk in self.blocks:
            if not blk['is_first']:
                res *= 2
            for _ in range(2):
                noises.append(jax.random.normal(next(keys), (batch, res, res),
                                                jnp.float32))
        return noises

    def __call__(self, w_latent, noises):
        B = w_latent.shape[0]
        cd = self.compute_dtype

        # 1) All AdaIN affines of the whole network in ONE Pallas matmul.
        styles = linear_pallas(w_latent, self.affine_w_t, self.affine_bias)

        def style(bi, name):
            lo, hi = self.style_slices[bi][name]
            return styles[:, lo:hi]

        # 2) Synthesis body.
        x = jnp.broadcast_to(self.x_init, (B,) + self.x_init.shape[1:]).astype(cd)
        ni = 0
        for bi, blk in enumerate(self.blocks):
            if not blk['is_first']:
                x = upsample_nearest2x(x)
                x = conv2d_pallas(blk['conv0'], x, cd)
            x = noise_adain_lrelu(x, noises[ni], blk['noise0'],
                                  style(bi, 'ada0_s'), style(bi, 'ada0_b'), cd)
            ni += 1
            x = conv2d_pallas(blk['conv1'], x, cd)
            x = noise_adain_lrelu(x, noises[ni], blk['noise1'],
                                  style(bi, 'ada1_s'), style(bi, 'ada1_b'), cd)
            ni += 1

        # 3) toRGB (1x1 conv), emitted in f32.
        img = conv2d_pallas(self.to_rgb, x, jnp.float32)
        return jnp.transpose(img, (0, 3, 1, 2))   # NHWC -> NCHW


# ---------------------------------------------------------------------------
# Pure-JAX reference (mirrors the PyTorch semantics layer by layer)
# ---------------------------------------------------------------------------
def _ref_conv(p, x):
    k, pad = p['ksize'], p['padding']
    w_hwio = jnp.transpose(p['w'], (2, 3, 1, 0)) * p['weight_gain']
    if pad:
        x = jnp.pad(x, ((0, 0), (pad, pad), (pad, pad), (0, 0)), mode='reflect')
    y = jax.lax.conv_general_dilated(
        x, w_hwio, window_strides=(1, 1), padding='VALID',
        dimension_numbers=('NHWC', 'HWIO', 'NHWC'))
    return y + p['bias']


def _ref_linear(p, w_latent):
    return w_latent @ (p['w'].T * p['weight_gain']) + p['bias'] * p['bias_gain']


def _ref_noise_adain_lrelu(x, noise, nscale, s, b):
    B = x.shape[0]
    x = x + nscale.reshape(1, 1, 1, -1) * noise[..., None]
    mean = x.mean(axis=(1, 2), keepdims=True)
    var = x.var(axis=(1, 2), keepdims=True)   # biased, like InstanceNorm2d
    xn = (x - mean) / jnp.sqrt(var + INSTANCE_NORM_EPS)
    y = xn * s.reshape(B, 1, 1, -1) + b.reshape(B, 1, 1, -1)
    return jnp.where(y >= 0.0, y, LEAKY_SLOPE * y)


def reference_forward(net, w_latent, noises):
    B = w_latent.shape[0]
    x = jnp.broadcast_to(net.x_init, (B,) + net.x_init.shape[1:])
    ni = 0
    for blk in net.blocks:
        if not blk['is_first']:
            x = upsample_nearest2x(x)
            x = _ref_conv(blk['conv0'], x)
        x = _ref_noise_adain_lrelu(x, noises[ni], blk['noise0'],
                                   _ref_linear(blk['ada0_s'], w_latent),
                                   _ref_linear(blk['ada0_b'], w_latent))
        ni += 1
        x = _ref_conv(blk['conv1'], x)
        x = _ref_noise_adain_lrelu(x, noises[ni], blk['noise1'],
                                   _ref_linear(blk['ada1_s'], w_latent),
                                   _ref_linear(blk['ada1_b'], w_latent))
        ni += 1
    img = _ref_conv(net.to_rgb, x)
    return jnp.transpose(img, (0, 3, 1, 2))


# ---------------------------------------------------------------------------
if __name__ == "__main__":
    key = jax.random.PRNGKey(0)
    k_params, k_latent, k_noise = jax.random.split(key, 3)

    # Small demo sizes (structure identical to the spec; channel/latent widths
    # reduced from 512 so the example stays tiny).
    batch = 2
    final_resolution = 8

    # f32 compute path: tight check against the pure-JAX reference.
    net32 = SynthesisNetworkPallas(final_resolution, max_channels=64,
                                   latent_dim=64, key=k_params,
                                   compute_dtype=jnp.float32)
    w_latent = jax.random.normal(k_latent, (batch, net32.latent_dim), jnp.float32)
    noises = net32.make_noises(k_noise, batch)

    img32 = jax.block_until_ready(net32(w_latent, noises))
    assert img32.shape == (batch, NUM_IMG_CHANNELS, final_resolution, final_resolution)
    ref = reference_forward(net32, w_latent, noises)
    err32 = float(jnp.max(jnp.abs(img32 - ref)))
    assert jnp.allclose(img32, ref, atol=5e-3, rtol=5e-3), f"f32 max abs err {err32}"

    # bf16 MXU path (recommended production setting): same weights (same key),
    # looser tolerance against the f32 reference.
    net16 = SynthesisNetworkPallas(final_resolution, max_channels=64,
                                   latent_dim=64, key=k_params,
                                   compute_dtype=jnp.bfloat16)
    img16 = jax.block_until_ready(net16(w_latent, noises))
    assert img16.shape == img32.shape
    assert bool(jnp.all(jnp.isfinite(img16)))
    err16 = float(jnp.max(jnp.abs(img16 - ref)))
    scale = float(jnp.max(jnp.abs(ref)))
    assert err16 < 0.1 * scale + 0.1, f"bf16 max abs err {err16} (scale {scale})"

    print("KERNEL_OK")
</pallas_src>

<mosaic_0001>
module attributes {stable_mosaic.version = 11 : i64} {
  func.func @_linear_kernel(%arg0: i32, %arg1: memref<8x64xf32, #tpu.memory_space<vmem>>, %arg2: memref<64x512xf32, #tpu.memory_space<vmem>>, %arg3: memref<1x512xf32, #tpu.memory_space<vmem>>, %arg4: memref<8x512xf32, #tpu.memory_space<vmem>>) attributes {dimension_semantics = [#tpu.dimension_semantics<arbitrary>], iteration_bounds = array<i64: 1>, scalar_prefetch = 0 : i64, scratch_operands = 0 : i64, tpu.core_type = #tpu.core_type<tc>, window_params = [{pipeline_mode = #tpu.pipeline_mode<synchronous>, transform_indices = @transform_0, window_bounds = array<i64: 8, 64>}, {pipeline_mode = #tpu.pipeline_mode<synchronous>, transform_indices = @transform_1, window_bounds = array<i64: 64, 512>}, {pipeline_mode = #tpu.pipeline_mode<synchronous>, transform_indices = @transform_2, window_bounds = array<i64: 1, 512>}, {pipeline_mode = #tpu.pipeline_mode<synchronous>, transform_indices = @transform_3, window_bounds = array<i64: 8, 512>}]} {
    %c0 = arith.constant 0 : index
    %c0_0 = arith.constant 0 : index
    %0 = vector.load %arg1[%c0, %c0_0] : memref<8x64xf32, #tpu.memory_space<vmem>>, vector<8x64xf32>
    %c0_1 = arith.constant 0 : index
    %c0_2 = arith.constant 0 : index
    %1 = vector.load %arg2[%c0_1, %c0_2] : memref<64x512xf32, #tpu.memory_space<vmem>>, vector<64x512xf32>
    %cst = arith.constant dense<0.000000e+00> : vector<8x512xf32>
    %2 = tpu.matmul %0, %1, %cst {dimension_numbers = #tpu.dot_dimension_numbers<[1], [0], [0], [1], [0, 0, 1, 1], [], []>} : vector<8x64xf32>, vector<64x512xf32>, vector<8x512xf32> -> vector<8x512xf32>
    %c0_3 = arith.constant 0 : index
    %c0_4 = arith.constant 0 : index
    %3 = vector.load %arg3[%c0_3, %c0_4] : memref<1x512xf32, #tpu.memory_space<vmem>>, vector<1x512xf32>
    %4 = vector.broadcast %3 : vector<1x512xf32> to vector<8x512xf32>
    %5 = arith.addf %2, %4 : vector<8x512xf32>
    %c0_5 = arith.constant 0 : index
    %c0_6 = arith.constant 0 : index
    %6 = vector.load %arg4[%c0_5, %c0_6] : memref<8x512xf32, #tpu.memory_space<vmem>>, vector<8x512xf32>
    tpu.vector_store %arg4[%c0_5, %c0_6], %5 {strides = array<i32>} : memref<8x512xf32, #tpu.memory_space<vmem>>, vector<8x512xf32>,
    return
  }
  func.func @transform_0(%arg0: i32) -> (i32, i32) {
    %c0_i32 = arith.constant 0 : i32
    %c0_i32_0 = arith.constant 0 : i32
    %c0_i32_1 = arith.constant 0 : i32
    return %c0_i32, %c0_i32_0 : i32, i32
  }
  func.func @transform_1(%arg0: i32) -> (i32, i32) {
    %c0_i32 = arith.constant 0 : i32
    %c0_i32_0 = arith.constant 0 : i32
    %c0_i32_1 = arith.constant 0 : i32
    return %c0_i32, %c0_i32_0 : i32, i32
  }
  func.func @transform_2(%arg0: i32) -> (i32, i32) {
    %c0_i32 = arith.constant 0 : i32
    %c0_i32_0 = arith.constant 0 : i32
    %c0_i32_1 = arith.constant 0 : i32
    return %c0_i32, %c0_i32_0 : i32, i32
  }
  func.func @transform_3(%arg0: i32) -> (i32, i32) {
    %c0_i32 = arith.constant 0 : i32
    %c0_i32_0 = arith.constant 0 : i32
    %c0_i32_1 = arith.constant 0 : i32
    return %c0_i32, %c0_i32_0 : i32, i32
  }
}

</mosaic_0001>

<llo_original>
// kernel: tpu_custom_call.1
$region0: #{tpu_custom_call.1}
  #allocation0 [shape = 'u32[]', space=smem, size = 0x4, offset = 0x4, fixed_abs, tag = 'smem constant byte address 0x4 - core index']
  #allocation1 [shape = 'u32[72,128]{1,0:T(1,128)}', space=vmem, size = 0x9000, scoped, tag = 'internal scratch']
  %s0 = inlined_call_operand.hbm [shape: f32[8,64], index: 0, kind: input, shape index: {}]
  %s1 = inlined_call_operand.hbm [shape: f32[64,512], index: 1, kind: input, shape index: {}]
  %s2 = inlined_call_operand.hbm [shape: f32[1,512], index: 2, kind: input, shape index: {}]
  %s3 = inlined_call_operand.hbm [shape: f32[8,512], index: 3, kind: output, shape index: {}]
  %s4 = sld [smem:[#allocation0]]
  $region34: #{tpu_custom_call.1} parent=0
    _
  %s6 = ssub.s32 1, %s4
  %s7 = scalar_select 0, %s6, %s4
  $region1: #{tpu_custom_call.1} parent=0
    #allocation2 [shape = 'u8[4096]{0}', space=vmem, size = 0x1000, scoped, tag = 'input window, operand 0, single buffered']
    #allocation3 [shape = 's32[1]{0}', space=sflag, size = 0x4, scoped, tag = 'scoped memory for tpu_custom_call.1']
    #allocation4 [shape = 's32[1]{0}', space=sflag, size = 0x4, scoped, tag = 'scoped memory for tpu_custom_call.1']
    #allocation5 [shape = 'u8[131072]{0}', space=vmem, size = 0x20000, scoped, tag = 'input window, operand 1, single buffered']
    #allocation6 [shape = 's32[1]{0}', space=sflag, size = 0x4, scoped, tag = 'scoped memory for tpu_custom_call.1']
    #allocation7 [shape = 'u8[2048]{0}', space=vmem, size = 0x800, scoped, tag = 'input window, operand 2, single buffered']
    #allocation8 [shape = 'u8[16384]{0}', space=vmem, size = 0x4000, scoped, tag = 'output window, operand 0, single buffered']
    %8 = vsyncpa [#allocation3], 0
    %9 = vsyncpa [#allocation6], 0
    %10 = vsyncpa [#allocation4], 0
    // Predicated region
    $region2: #{tpu_custom_call.1} parent=1 // pred_check
      _
    $region3: #{tpu_custom_call.1} parent=1 // pred_check_branch
      %12 = sbr.rel (0) target = $region5
    $region4: #{tpu_custom_call.1} parent=1 // pred_region
      %14 = vsyncadd [#allocation3], 0
      %s16 = sshll.u32 %s0, 4
      %s17 = int_to_ptr.hbm [resolvable:$true] %s16
      %s18 = sshll.u32 [#allocation2], 4
      %s19 = int_to_ptr.vmem [resolvable:$true] %s18
      %21 = dma.hbm_to_vmem [thread:$0]  %s17, 128, %s19, [#allocation3]
    $region5: #{tpu_custom_call.1} parent=1 // pred_fallthru
      _
    // Predicated region
    $region6: #{tpu_custom_call.1} parent=1 // pred_check
      _
    $region7: #{tpu_custom_call.1} parent=1 // pred_check_branch
      %23 = sbr.rel (0) target = $region9
    $region8: #{tpu_custom_call.1} parent=1 // pred_region
      %25 = vsyncadd [#allocation6], 0
      %s26 = sshll.u32 %s1, 4
      %s27 = int_to_ptr.hbm [resolvable:$true] %s26
      %s28 = sshll.u32 [#allocation5], 4
      %s29 = int_to_ptr.vmem [resolvable:$true] %s28
      %34 = dma.hbm_to_vmem [thread:$0]  %s27, 4096, %s29, [#allocation6], 512, 512, 32
    $region9: #{tpu_custom_call.1} parent=1 // pred_fallthru
      _
    // Predicated region
    $region10: #{tpu_custom_call.1} parent=1 // pred_check
      _
    $region11: #{tpu_custom_call.1} parent=1 // pred_check_branch
      %36 = sbr.rel (0) target = $region13
    $region12: #{tpu_custom_call.1} parent=1 // pred_region
      %38 = vsyncadd [#allocation6], 0
      %s40 = sshll.u32 %s2, 4
      %s41 = int_to_ptr.hbm [resolvable:$true] %s40
      %s42 = sshll.u32 [#allocation7], 4
      %s43 = int_to_ptr.vmem [resolvable:$true] %s42
      %45 = dma.hbm_to_vmem [thread:$0]  %s41, 64, %s43, [#allocation6]
    $region13: #{tpu_custom_call.1} parent=1 // pred_fallthru
      _
    // Predicated region
    $region14: #{tpu_custom_call.1} parent=1 // pred_check
      _
    $region15: #{tpu_custom_call.1} parent=1 // pred_check_branch
      %47 = sbr.rel (0) target = $region17
    $region16: #{tpu_custom_call.1} parent=1 // pred_region
      %49 = dma.done [#allocation3], 128
    $region17: #{tpu_custom_call.1} parent=1 // pred_fallthru
      _
    // Predicated region
    $region18: #{tpu_custom_call.1} parent=1 // pred_check
      _
    $region19: #{tpu_custom_call.1} parent=1 // pred_check_branch
      %51 = sbr.rel (0) target = $region21
    $region20: #{tpu_custom_call.1} parent=1 // pred_region
      %53 = dma.done [#allocation6], 4096
    $region21: #{tpu_custom_call.1} parent=1 // pred_fallthru
      _
    // Predicated region
    $region22: #{tpu_custom_call.1} parent=1 // pred_check
      _
    $region23: #{tpu_custom_call.1} parent=1 // pred_check_branch
      %55 = sbr.rel (0) target = $region25
    $region24: #{tpu_custom_call.1} parent=1 // pred_region
      %57 = dma.done [#allocation6], 64
    $region25: #{tpu_custom_call.1} parent=1 // pred_fallthru
      _
    %v58 = vld [vmem:[#allocation2] sm:$0xff]
    %v59 = vld [vmem:[#allocation5] sm:$0xff]
    %v60 = vld [vmem:[#allocation5 + $0x8] sm:$0xff]
    %v61 = vld [vmem:[#allocation5 + $0x10] sm:$0xff]
    %v62 = vld [vmem:[#allocation5 + $0x18] sm:$0xff]
    %v63 = vld [vmem:[#allocation5 + $0x20] sm:$0xff]
    %v64 = vld [vmem:[#allocation5 + $0x28] sm:$0xff]
    %v65 = vld [vmem:[#allocation5 + $0x30] sm:$0xff]
    %v66 = vld [vmem:[#allocation5 + $0x38] sm:$0xff]
    %v67 = vld [vmem:[#allocation5 + $0x40] sm:$0xff]
    %v68 = vld [vmem:[#allocation5 + $0x48] sm:$0xff]
    %v69 = vld [vmem:[#allocation5 + $0x50] sm:$0xff]
    %v70 = vld [vmem:[#allocation5 + $0x58] sm:$0xff]
    %v71 = vld [vmem:[#allocation5 + $0x60] sm:$0xff]
    %v72 = vld [vmem:[#allocation5 + $0x68] sm:$0xff]
    %v73 = vld [vmem:[#allocation5 + $0x70] sm:$0xff]
    %v74 = vld [vmem:[#allocation5 + $0x78] sm:$0xff]
    %v75 = vld [vmem:[#allocation5 + $0x80] sm:$0xff]
    %v76 = vld [vmem:[#allocation5 + $0x88] sm:$0xff]
    %v77 = vld [vmem:[#allocation5 + $0x90] sm:$0xff]
    %v78 = vld [vmem:[#allocation5 + $0x98] sm:$0xff]
    %v79 = vld [vmem:[#allocation5 + $0xa0] sm:$0xff]
    %v80 = vld [vmem:[#allocation5 + $0xa8] sm:$0xff]
    %v81 = vld [vmem:[#allocation5 + $0xb0] sm:$0xff]
    %v82 = vld [vmem:[#allocation5 + $0xb8] sm:$0xff]
    %v83 = vld [vmem:[#allocation5 + $0xc0] sm:$0xff]
    %v84 = vld [vmem:[#allocation5 + $0xc8] sm:$0xff]
    %v85 = vld [vmem:[#allocation5 + $0xd0] sm:$0xff]
    %v86 = vld [vmem:[#allocation5 + $0xd8] sm:$0xff]
    %v87 = vld [vmem:[#allocation5 + $0xe0] sm:$0xff]
    %v88 = vld [vmem:[#allocation5 + $0xe8] sm:$0xff]
    %v89 = vld [vmem:[#allocation5 + $0xf0] sm:$0xff]
    %v90 = vld [vmem:[#allocation5 + $0xf8] sm:$0xff]
    %v91 = vld [vmem:[#allocation7] sm:$0xf]
    %v93 = vperm.slane %v91, 0
    %v94 = vperm.slane %v91, 1
    %v95 = vperm.slane %v91, 2
    %v96 = vperm.slane %v91, 3
    %vm101 = vcmask 523264
    %v103 = vsel %vm101, %v58, 0
    %105 = vmatpush.msra.mxu0 0.0
    %106 = vmatpush.msra.mxu0 0.0
    %107 = vmatpush.msra.mxu0 0.0
    %108 = vmatpush.msra.mxu0 0.0
    %109 = vmatpush.msra.mxu0 0.0
    %110 = vmatpush.msra.mxu0 0.0
    %111 = vmatpush.msra.mxu0 0.0
    %112 = vmatpush.msra.mxu0 0.0
    %113 = vmatpush.msra.mxu0 %v87
    %114 = vmatpush.msra.mxu0 %v83
    %115 = vmatpush.msra.mxu0 %v79
    %116 = vmatpush.msra.mxu0 %v75
    %117 = vmatpush.msra.mxu0 %v71
    %118 = vmatpush.msra.mxu0 %v67
    %119 = vmatpush.msra.mxu0 %v63
    %120 = vmatpush.msra.mxu0 %v59
    %121 = vmatmul.f32.gmra.mxu0 %v103
    %v122 = vpop.f32.mrf.mxu0
    %v123 = vadd.f32 %v93, %v122
    %124 = vdwg.mxu0
    %125 = vmatpush.msra.mxu0 0.0
    %126 = vmatpush.msra.mxu0 0.0
    %127 = vmatpush.msra.mxu0 0.0
    %128 = vmatpush.msra.mxu0 0.0
    %129 = vmatpush.msra.mxu0 0.0
    %130 = vmatpush.msra.mxu0 0.0
    %131 = vmatpush.msra.mxu0 0.0
    %132 = vmatpush.msra.mxu0 0.0
    %133 = vmatpush.msra.mxu0 %v88
    %134 = vmatpush.msra.mxu0 %v84
    %135 = vmatpush.msra.mxu0 %v80
    %136 = vmatpush.msra.mxu0 %v76
    %137 = vmatpush.msra.mxu0 %v72
    %138 = vmatpush.msra.mxu0 %v68
    %139 = vmatpush.msra.mxu0 %v64
    %140 = vmatpush.msra.mxu0 %v60
    %141 = vmatmul.f32.gmra.mxu0 %v103
    %v142 = vpop.f32.mrf.mxu0
    %v143 = vadd.f32 %v94, %v142
    %144 = vdwg.mxu0
    %145 = vmatpush.msra.mxu0 0.0
    %146 = vmatpush.msra.mxu0 0.0
    %147 = vmatpush.msra.mxu0 0.0
    %148 = vmatpush.msra.mxu0 0.0
    %149 = vmatpush.msra.mxu0 0.0
    %150 = vmatpush.msra.mxu0 0.0
    %151 = vmatpush.msra.mxu0 0.0
    %152 = vmatpush.msra.mxu0 0.0
    %153 = vmatpush.msra.mxu0 %v89
    %154 = vmatpush.msra.mxu0 %v85
    %155 = vmatpush.msra.mxu0 %v81
    %156 = vmatpush.msra.mxu0 %v77
    %157 = vmatpush.msra.mxu0 %v73
    %158 = vmatpush.msra.mxu0 %v69
    %159 = vmatpush.msra.mxu0 %v65
    %160 = vmatpush.msra.mxu0 %v61
    %161 = vmatmul.f32.gmra.mxu0 %v103
    %v162 = vpop.f32.mrf.mxu0
    %v163 = vadd.f32 %v95, %v162
    %164 = vdwg.mxu0
    %165 = vmatpush.msra.mxu0 0.0
    %166 = vmatpush.msra.mxu0 0.0
    %167 = vmatpush.msra.mxu0 0.0
    %168 = vmatpush.msra.mxu0 0.0
    %169 = vmatpush.msra.mxu0 0.0
    %170 = vmatpush.msra.mxu0 0.0
    %171 = vmatpush.msra.mxu0 0.0
    %172 = vmatpush.msra.mxu0 0.0
    %173 = vmatpush.msra.mxu0 %v90
    %174 = vmatpush.msra.mxu0 %v86
    %175 = vmatpush.msra.mxu0 %v82
    %176 = vmatpush.msra.mxu0 %v78
    %177 = vmatpush.msra.mxu0 %v74
    %178 = vmatpush.msra.mxu0 %v70
    %179 = vmatpush.msra.mxu0 %v66
    %180 = vmatpush.msra.mxu0 %v62
    %181 = vmatmul.f32.gmra.mxu0 %v103
    %v182 = vpop.f32.mrf.mxu0
    %v183 = vadd.f32 %v96, %v182
    %184 = vdwg.mxu0
    %185 = vst [vmem:[#allocation8] sm:$0xff] %v123
    %186 = vst [vmem:[#allocation8 + $0x8] sm:$0xff] %v143
    %187 = vst [vmem:[#allocation8 + $0x10] sm:$0xff] %v163
    %188 = vst [vmem:[#allocation8 + $0x18] sm:$0xff] %v183
    // Predicated region
    $region26: #{tpu_custom_call.1} parent=1 // pred_check
      _
    $region27: #{tpu_custom_call.1} parent=1 // pred_check_branch
      %190 = sbr.rel (0) target = $region29
    $region28: #{tpu_custom_call.1} parent=1 // pred_region
      %192 = vsyncadd [#allocation4], 0
      %s194 = sshll.u32 [#allocation8], 4
      %s195 = int_to_ptr.vmem [resolvable:$true] %s194
      %s196 = sshll.u32 %s3, 4
      %s197 = int_to_ptr.hbm [resolvable:$true] %s196
      %199 = dma.vmem_to_hbm [thread:$0]  %s195, 512, %s197, [#allocation4]
    $region29: #{tpu_custom_call.1} parent=1 // pred_fallthru
      _
    // Predicated region
    $region30: #{tpu_custom_call.1} parent=1 // pred_check
      _
    $region31: #{tpu_custom_call.1} parent=1 // pred_check_branch
      %201 = sbr.rel (0) target = $region33
    $region32: #{tpu_custom_call.1} parent=1 // pred_region
      %203 = dma.done [#allocation4], 512
    $region33: #{tpu_custom_call.1} parent=1 // pred_fallthru
      _
    %204 = vsyncpa [#allocation3], 1
    %205 = vsyncpa [#allocation6], 1
    %206 = vsyncpa [#allocation4], 1

</llo_original>
